<compile_context>
chip_gen: v7x
topology: tpu7x:2x2x1
jax: 0.10.0
libtpu: 0.0.40
codegen_flags: <defaults>
</compile_context>

<pallas_src>
import functools

import jax
import jax.numpy as jnp
from jax import lax
from jax.experimental import pallas as pl
from jax.experimental.pallas import tpu as pltpu


def _gvp_layernorm_kernel(s_ref, v_ref, g_ref, b_ref, s_out_ref, v_out_ref,
                          *, eps, sqrt_v):
    # ---- scalar features: LayerNorm over channels (lane axis) -------------
    s = s_ref[...].astype(jnp.float32)                          # (T, S)
    mean = jnp.mean(s, axis=-1, keepdims=True)                  # (T, 1)
    centred = s - mean
    var = jnp.mean(centred * centred, axis=-1, keepdims=True)   # biased, like torch
    s_norm = centred * lax.rsqrt(var + eps)
    gamma = g_ref[...]                                           # (1, S) f32
    beta = b_ref[...]                                            # (1, S) f32
    s_out_ref[...] = (s_norm * gamma + beta).astype(s_out_ref.dtype)

    # ---- vector features: scale per-node Frobenius norm to sqrt(V) --------
    v = v_ref[...].astype(jnp.float32)                           # (T, V*3)
    sq = jnp.sum(v * v, axis=-1, keepdims=True)                  # (T, 1)
    # rsqrt(0) = inf is selected away; zero-norm nodes stay untouched.
    scale = jnp.where(sq > 0.0, sqrt_v * lax.rsqrt(sq), 1.0)
    v_out_ref[...] = (v * scale).astype(v_out_ref.dtype)


def _round_up(x, m):
    return ((x + m - 1) // m) * m


def _pick_tile(N, S, V3, s_itemsize, v_itemsize, budget_bytes, min_steps=2):
    """Rows per grid step, sized from a VMEM budget (incl. lane padding)."""
    # in + out, each double-buffered, lanes padded to 128 in VMEM.
    per_node = 2 * 2 * (_round_up(S, 128) * s_itemsize
                        + _round_up(V3, 128) * v_itemsize)
    tile = max(budget_bytes // per_node, 8)
    tile = (tile // 8) * 8                  # sublane constraint (2nd-to-last dim)
    # Ensure >= min_steps grid steps for megacore (v7x) once N is non-trivial.
    if N > 256:
        tile = min(tile, _round_up(-(-N // min_steps), 128))
    if tile >= N:
        return N                            # single full-extent block (always legal)
    return tile


def gvp_layernorm(scalar_features, vector_features, gamma=None, beta=None,
                  *, eps=1e-5, vmem_budget_bytes=24 * 1024 * 1024):
    """GVPLayerNorm forward. Returns (normalised_scalars, normalised_vectors)."""
    N, S = scalar_features.shape
    n2, V, three = vector_features.shape
    assert n2 == N and three == 3

    # LN affine params kept in float32 (matches PyTorch; avoids double rounding).
    if gamma is None:
        gamma = jnp.ones((S,), jnp.float32)
    if beta is None:
        beta = jnp.zeros((S,), jnp.float32)
    g = jnp.asarray(gamma, jnp.float32).reshape(1, S)
    b = jnp.asarray(beta, jnp.float32).reshape(1, S)

    # Native row-major layouts; (N, V, 3) -> (N, 3V) is a contiguous (free) reshape.
    v_flat = vector_features.reshape(N, V * 3)

    tile = _pick_tile(N, S, V * 3,
                      scalar_features.dtype.itemsize,
                      vector_features.dtype.itemsize,
                      vmem_budget_bytes)
    grid = (pl.cdiv(N, tile),)

    kernel = functools.partial(
        _gvp_layernorm_kernel, eps=float(eps), sqrt_v=float(V) ** 0.5)

    s_bytes = scalar_features.size * scalar_features.dtype.itemsize
    v_bytes = vector_features.size * vector_features.dtype.itemsize

    s_out, v_out_flat = pl.pallas_call(
        kernel,
        grid=grid,
        in_specs=[
            pl.BlockSpec((tile, S), lambda i: (i, 0)),        # scalars (N, S)
            pl.BlockSpec((tile, V * 3), lambda i: (i, 0)),    # vectors (N, 3V)
            pl.BlockSpec((1, S), lambda i: (0, 0)),           # gamma (f32)
            pl.BlockSpec((1, S), lambda i: (0, 0)),           # beta  (f32)
        ],
        out_specs=(
            pl.BlockSpec((tile, S), lambda i: (i, 0)),
            pl.BlockSpec((tile, V * 3), lambda i: (i, 0)),
        ),
        out_shape=(
            jax.ShapeDtypeStruct((N, S), scalar_features.dtype),
            jax.ShapeDtypeStruct((N, V * 3), vector_features.dtype),
        ),
        compiler_params=pltpu.CompilerParams(
            dimension_semantics=("parallel",),
            vmem_limit_bytes=32 * 1024 * 1024),
        cost_estimate=pl.CostEstimate(
            flops=int(8 * scalar_features.size + 4 * vector_features.size),
            transcendentals=int(2 * N),
            bytes_accessed=int(2 * (s_bytes + v_bytes))),
    )(scalar_features, v_flat, g, b)

    return s_out, v_out_flat.reshape(N, V, 3)    # contiguous (free) reshape back


def _reference(scalar_features, vector_features, gamma, beta, eps=1e-5):
    mean = jnp.mean(scalar_features, axis=-1, keepdims=True)
    var = jnp.mean((scalar_features - mean) ** 2, axis=-1, keepdims=True)
    s_norm = (scalar_features - mean) / jnp.sqrt(var + eps) * gamma + beta
    norm = jnp.sqrt(jnp.sum(vector_features ** 2, axis=(-2, -1), keepdims=True))
    sqrt_v = jnp.sqrt(jnp.asarray(vector_features.shape[-2], jnp.float32))
    v_norm = jnp.where(norm > 0.0, sqrt_v * vector_features / norm, vector_features)
    return s_norm, v_norm


if __name__ == "__main__":
    key = jax.random.PRNGKey(0)
    k_s, k_v, k_s2, k_v2 = jax.random.split(key, 4)

    # ---- small primary case -------------------------------------------------
    N, S, V = 16, 32, 4   # nodes, scalar_channels, vector_channels
    scalar_features = jax.random.normal(k_s, (N, S), dtype=jnp.float32)
    vector_features = jax.random.normal(k_v, (N, V, 3), dtype=jnp.float32)
    # include a zero-norm node to exercise the where() branch
    vector_features = vector_features.at[3].set(0.0)

    s_out, v_out = gvp_layernorm(scalar_features, vector_features)
    jax.block_until_ready((s_out, v_out))

    gamma0 = jnp.ones((S,), jnp.float32)
    beta0 = jnp.zeros((S,), jnp.float32)
    s_ref, v_ref = _reference(scalar_features, vector_features, gamma0, beta0)

    assert s_out.shape == (N, S) and v_out.shape == (N, V, 3)
    assert bool(jnp.allclose(s_out, s_ref, atol=1e-5, rtol=1e-5))
    assert bool(jnp.allclose(v_out, v_ref, atol=1e-5, rtol=1e-5))

    # ---- multi-step grid + ragged last block case ---------------------------
    N2 = 300
    scalar2 = jax.random.normal(k_s2, (N2, S), dtype=jnp.float32)
    vector2 = jax.random.normal(k_v2, (N2, V, 3), dtype=jnp.float32)
    vector2 = vector2.at[257].set(0.0)   # zero-norm node inside the ragged block

    s_out2, v_out2 = gvp_layernorm(scalar2, vector2)
    jax.block_until_ready((s_out2, v_out2))
    s_ref2, v_ref2 = _reference(scalar2, vector2, gamma0, beta0)
    assert bool(jnp.allclose(s_out2, s_ref2, atol=1e-5, rtol=1e-5))
    assert bool(jnp.allclose(v_out2, v_ref2, atol=1e-5, rtol=1e-5))

    print("KERNEL_OK")
</pallas_src>

<mosaic_0001>
module attributes {stable_mosaic.version = 11 : i64} {
  func.func @_gvp_layernorm_kernel(%arg0: i32, %arg1: memref<16x32xf32, #tpu.memory_space<vmem>>, %arg2: memref<16x12xf32, #tpu.memory_space<vmem>>, %arg3: memref<1x32xf32, #tpu.memory_space<vmem>>, %arg4: memref<1x32xf32, #tpu.memory_space<vmem>>, %arg5: memref<16x32xf32, #tpu.memory_space<vmem>>, %arg6: memref<16x12xf32, #tpu.memory_space<vmem>>) attributes {dimension_semantics = [#tpu.dimension_semantics<parallel>], iteration_bounds = array<i64: 1>, scalar_prefetch = 0 : i64, scratch_operands = 0 : i64, tpu.core_type = #tpu.core_type<tc>, window_params = [{transform_indices = @transform_0, window_bounds = array<i64: 16, 32>}, {transform_indices = @transform_1, window_bounds = array<i64: 16, 12>}, {pipeline_mode = #tpu.pipeline_mode<synchronous>, transform_indices = @transform_2, window_bounds = array<i64: 1, 32>}, {pipeline_mode = #tpu.pipeline_mode<synchronous>, transform_indices = @transform_3, window_bounds = array<i64: 1, 32>}, {transform_indices = @transform_4, window_bounds = array<i64: 16, 32>}, {transform_indices = @transform_5, window_bounds = array<i64: 16, 12>}]} {
    %c0 = arith.constant 0 : index
    %c0_0 = arith.constant 0 : index
    %0 = vector.load %arg1[%c0, %c0_0] : memref<16x32xf32, #tpu.memory_space<vmem>>, vector<16x32xf32>
    %cst = arith.constant dense<0.000000e+00> : vector<16xf32>
    %1 = vector.multi_reduction <add>, %0, %cst [1] : vector<16x32xf32> to vector<16xf32>
    %2 = vector.shape_cast %1 : vector<16xf32> to vector<16x1xf32>
    %cst_1 = arith.constant 3.200000e+01 : f32
    %3 = vector.broadcast %cst_1 : f32 to vector<16x1xf32>
    %4 = arith.divf %2, %3 : vector<16x1xf32>
    %5 = vector.broadcast %4 : vector<16x1xf32> to vector<16x32xf32>
    %6 = arith.subf %0, %5 : vector<16x32xf32>
    %7 = arith.mulf %6, %6 : vector<16x32xf32>
    %cst_2 = arith.constant dense<0.000000e+00> : vector<16xf32>
    %8 = vector.multi_reduction <add>, %7, %cst_2 [1] : vector<16x32xf32> to vector<16xf32>
    %9 = vector.shape_cast %8 : vector<16xf32> to vector<16x1xf32>
    %cst_3 = arith.constant 3.200000e+01 : f32
    %10 = vector.broadcast %cst_3 : f32 to vector<16x1xf32>
    %11 = arith.divf %9, %10 : vector<16x1xf32>
    %cst_4 = arith.constant 9.99999974E-6 : f32
    %12 = vector.broadcast %cst_4 : f32 to vector<16x1xf32>
    %13 = arith.addf %11, %12 : vector<16x1xf32>
    %14 = math.rsqrt %13 : vector<16x1xf32>
    %15 = vector.broadcast %14 : vector<16x1xf32> to vector<16x32xf32>
    %16 = arith.mulf %6, %15 : vector<16x32xf32>
    %c0_5 = arith.constant 0 : index
    %c0_6 = arith.constant 0 : index
    %17 = vector.load %arg3[%c0_5, %c0_6] : memref<1x32xf32, #tpu.memory_space<vmem>>, vector<1x32xf32>
    %c0_7 = arith.constant 0 : index
    %c0_8 = arith.constant 0 : index
    %18 = vector.load %arg4[%c0_7, %c0_8] : memref<1x32xf32, #tpu.memory_space<vmem>>, vector<1x32xf32>
    %19 = vector.broadcast %17 : vector<1x32xf32> to vector<16x32xf32>
    %20 = arith.mulf %16, %19 : vector<16x32xf32>
    %21 = vector.broadcast %18 : vector<1x32xf32> to vector<16x32xf32>
    %22 = arith.addf %20, %21 : vector<16x32xf32>
    %c0_9 = arith.constant 0 : index
    %c0_10 = arith.constant 0 : index
    %23 = vector.load %arg5[%c0_9, %c0_10] : memref<16x32xf32, #tpu.memory_space<vmem>>, vector<16x32xf32>
    tpu.vector_store %arg5[%c0_9, %c0_10], %22 {strides = array<i32>} : memref<16x32xf32, #tpu.memory_space<vmem>>, vector<16x32xf32>,
    %c0_11 = arith.constant 0 : index
    %c0_12 = arith.constant 0 : index
    %24 = vector.load %arg2[%c0_11, %c0_12] : memref<16x12xf32, #tpu.memory_space<vmem>>, vector<16x12xf32>
    %25 = arith.mulf %24, %24 : vector<16x12xf32>
    %cst_13 = arith.constant dense<0.000000e+00> : vector<16xf32>
    %26 = vector.multi_reduction <add>, %25, %cst_13 [1] : vector<16x12xf32> to vector<16xf32>
    %27 = vector.shape_cast %26 : vector<16xf32> to vector<16x1xf32>
    %cst_14 = arith.constant 0.000000e+00 : f32
    %28 = vector.broadcast %cst_14 : f32 to vector<16x1xf32>
    %29 = arith.cmpf ogt, %27, %28 : vector<16x1xf32>
    %30 = math.rsqrt %27 : vector<16x1xf32>
    %cst_15 = arith.constant 2.000000e+00 : f32
    %31 = vector.broadcast %cst_15 : f32 to vector<16x1xf32>
    %32 = arith.mulf %31, %30 : vector<16x1xf32>
    %cst_16 = arith.constant 1.000000e+00 : f32
    %33 = vector.broadcast %cst_16 : f32 to vector<16x1xf32>
    %34 = arith.select %29, %32, %33 : vector<16x1xi1>, vector<16x1xf32>
    %35 = vector.broadcast %34 : vector<16x1xf32> to vector<16x12xf32>
    %36 = arith.mulf %24, %35 : vector<16x12xf32>
    %c0_17 = arith.constant 0 : index
    %c0_18 = arith.constant 0 : index
    %37 = vector.load %arg6[%c0_17, %c0_18] : memref<16x12xf32, #tpu.memory_space<vmem>>, vector<16x12xf32>
    tpu.vector_store %arg6[%c0_17, %c0_18], %36 {strides = array<i32>} : memref<16x12xf32, #tpu.memory_space<vmem>>, vector<16x12xf32>,
    return
  }
  func.func @transform_0(%arg0: i32) -> (i32, i32) {
    %c0_i32 = arith.constant 0 : i32
    %c0_i32_0 = arith.constant 0 : i32
    return %arg0, %c0_i32 : i32, i32
  }
  func.func @transform_1(%arg0: i32) -> (i32, i32) {
    %c0_i32 = arith.constant 0 : i32
    %c0_i32_0 = arith.constant 0 : i32
    return %arg0, %c0_i32 : i32, i32
  }
  func.func @transform_2(%arg0: i32) -> (i32, i32) {
    %c0_i32 = arith.constant 0 : i32
    %c0_i32_0 = arith.constant 0 : i32
    %c0_i32_1 = arith.constant 0 : i32
    return %c0_i32, %c0_i32_0 : i32, i32
  }
  func.func @transform_3(%arg0: i32) -> (i32, i32) {
    %c0_i32 = arith.constant 0 : i32
    %c0_i32_0 = arith.constant 0 : i32
    %c0_i32_1 = arith.constant 0 : i32
    return %c0_i32, %c0_i32_0 : i32, i32
  }
  func.func @transform_4(%arg0: i32) -> (i32, i32) {
    %c0_i32 = arith.constant 0 : i32
    %c0_i32_0 = arith.constant 0 : i32
    return %arg0, %c0_i32 : i32, i32
  }
  func.func @transform_5(%arg0: i32) -> (i32, i32) {
    %c0_i32 = arith.constant 0 : i32
    %c0_i32_0 = arith.constant 0 : i32
    return %arg0, %c0_i32 : i32, i32
  }
}

</mosaic_0001>

<llo_original>
// kernel: tpu_custom_call.1
$region0: #{tpu_custom_call.1}
  #allocation0 [shape = 'u32[]', space=smem, size = 0x4, offset = 0x4, fixed_abs, tag = 'smem constant byte address 0x4 - core index']
  #allocation1 [shape = 'u32[144,128]{1,0:T(1,128)}', space=vmem, size = 0x12000, scoped, tag = 'internal scratch']
  %s0 = inlined_call_operand.hbm [shape: f32[16,32], index: 0, kind: input, shape index: {}]
  %s1 = inlined_call_operand.hbm [shape: f32[16,12], index: 1, kind: input, shape index: {}]
  %s2 = inlined_call_operand.vmem [shape: f32[1,32], index: 2, kind: input, shape index: {}]
  %s3 = inlined_call_operand.vmem [shape: f32[1,32], index: 3, kind: input, shape index: {}]
  %s4 = inlined_call_operand.hbm [shape: f32[16,32], index: 4, kind: output, shape index: {0}]
  %s5 = inlined_call_operand.hbm [shape: f32[16,12], index: 5, kind: output, shape index: {1}]
  %6 = xla_tuple %s4, %s5
  %s7 = sld [smem:[#allocation0]]
  $region42: #{tpu_custom_call.1} parent=0
    _
  %s9 = ssub.s32 1, %s7
  %s10 = scalar_select 0, %s9, %s7
  $region1: #{tpu_custom_call.1} parent=0
    #allocation2 [shape = 'u8[8192]{0}', space=vmem, size = 0x2000, scoped, tag = 'input window, operand 0, single buffered']
    #allocation3 [shape = 's32[1]{0}', space=sflag, size = 0x4, scoped, tag = 'scoped memory for tpu_custom_call.1']
    #allocation4 [shape = 's32[1]{0}', space=sflag, size = 0x4, scoped, tag = 'scoped memory for tpu_custom_call.1']
    #allocation5 [shape = 'u8[8192]{0}', space=vmem, size = 0x2000, scoped, tag = 'input window, operand 1, single buffered']
    #allocation6 [shape = 's32[1]{0}', space=sflag, size = 0x4, scoped, tag = 'scoped memory for tpu_custom_call.1']
    #allocation7 [shape = 'u8[8192]{0}', space=vmem, size = 0x2000, scoped, tag = 'output window, operand 0, single buffered']
    #allocation8 [shape = 'u8[8192]{0}', space=vmem, size = 0x2000, scoped, tag = 'output window, operand 1, single buffered']
    #allocation9 [shape = 's32[1]{0}', space=sflag, size = 0x4, scoped, tag = 'scoped memory for tpu_custom_call.1']
    %11 = vsyncpa [#allocation3], 0
    %12 = vsyncpa [#allocation6], 0
    %13 = vsyncpa [#allocation4], 0
    %14 = vsyncpa [#allocation9], 0
    // Predicated region
    $region2: #{tpu_custom_call.1} parent=1 // pred_check
      _
    $region3: #{tpu_custom_call.1} parent=1 // pred_check_branch
      %16 = sbr.rel (0) target = $region5
    $region4: #{tpu_custom_call.1} parent=1 // pred_region
      %s18 = ssub.s32 256, 256
      %19 = vsyncadd [#allocation3], %s18
      %s20 = sshll.u32 [#allocation2], 4
      %s21 = int_to_ptr.vmem [resolvable:$true] %s20
      %26 = dma.hbm_to_vmem [thread:$0]  %s0, 256, %s21, [#allocation3], 128, 128, 8
    $region5: #{tpu_custom_call.1} parent=1 // pred_fallthru
      _
    // Predicated region
    $region6: #{tpu_custom_call.1} parent=1 // pred_check
      _
    $region7: #{tpu_custom_call.1} parent=1 // pred_check_branch
      %28 = sbr.rel (0) target = $region9
    $region8: #{tpu_custom_call.1} parent=1 // pred_region
      %s30 = ssub.s32 256, 256
      %31 = vsyncadd [#allocation6], %s30
      %s32 = sshll.u32 [#allocation5], 4
      %s33 = int_to_ptr.vmem [resolvable:$true] %s32
      %38 = dma.hbm_to_vmem [thread:$0]  %s1, 256, %s33, [#allocation6], 128, 128, 8
    $region9: #{tpu_custom_call.1} parent=1 // pred_fallthru
      _
    // Predicated region
    $region10: #{tpu_custom_call.1} parent=1 // pred_check
      _
    $region11: #{tpu_custom_call.1} parent=1 // pred_check_branch
      %40 = sbr.rel (0) target = $region13
    $region12: #{tpu_custom_call.1} parent=1 // pred_region
      _
    $region13: #{tpu_custom_call.1} parent=1 // pred_fallthru
      _
    // Predicated region
    $region14: #{tpu_custom_call.1} parent=1 // pred_check
      _
    $region15: #{tpu_custom_call.1} parent=1 // pred_check_branch
      %42 = sbr.rel (0) target = $region17
    $region16: #{tpu_custom_call.1} parent=1 // pred_region
      _
    $region17: #{tpu_custom_call.1} parent=1 // pred_fallthru
      _
    // Predicated region
    $region18: #{tpu_custom_call.1} parent=1 // pred_check
      _
    $region19: #{tpu_custom_call.1} parent=1 // pred_check_branch
      %44 = sbr.rel (0) target = $region21
    $region20: #{tpu_custom_call.1} parent=1 // pred_region
      %45 = dma.done [#allocation3], 256
    $region21: #{tpu_custom_call.1} parent=1 // pred_fallthru
      _
    // Predicated region
    $region22: #{tpu_custom_call.1} parent=1 // pred_check
      _
    $region23: #{tpu_custom_call.1} parent=1 // pred_check_branch
      %47 = sbr.rel (0) target = $region25
    $region24: #{tpu_custom_call.1} parent=1 // pred_region
      %48 = dma.done [#allocation6], 256
    $region25: #{tpu_custom_call.1} parent=1 // pred_fallthru
      _
    %v49 = vld [vmem:[#allocation2] sm:$0xff]
    %v50 = vld [vmem:[#allocation2 + $0x8] sm:$0xff]
    %vm51 = vcmask 261120
    %v52 = vsel %vm51, %v49, 0.0
    %53 = vadd.xlane.f32.xlu0 %v52
    %v54 = vpop.xlane.xlu0 %53
    %v55 = vsel %vm51, %v50, 0.0
    %56 = vadd.xlane.f32.xlu0 %v55
    %v57 = vpop.xlane.xlu0 %56
    %v58 = vrcp.pop 32.0
    %v59 = vmul.f32 %v54, %v58
    %v60 = vmul.f32 %v57, %v58
    %v61 = vsub.f32 %v49, %v59
    %v62 = vsub.f32 %v50, %v60
    %v63 = vmul.f32 %v61, %v61
    %v64 = vmul.f32 %v62, %v62
    %v65 = vsel %vm51, %v63, 0.0
    %66 = vadd.xlane.f32.xlu0 %v65
    %v67 = vpop.xlane.xlu0 %66
    %v68 = vsel %vm51, %v64, 0.0
    %69 = vadd.xlane.f32.xlu0 %v68
    %v70 = vpop.xlane.xlu0 %69
    %v71 = vmul.f32 %v67, %v58
    %v72 = vmul.f32 %v70, %v58
    %v73 = vadd.f32 %v71, 1e-05
    %v74 = vadd.f32 %v72, 1e-05
    %v75 = vrsqrt.pop %v73
    %v76 = vrsqrt.pop %v74
    %v77 = vmul.f32 %v61, %v75
    %v78 = vmul.f32 %v62, %v76
    %v79 = vld [vmem:[%s2] sm:$0x1]
    %v80 = vld [vmem:[%s3] sm:$0x1]
    %v82 = vlaneseq
    %v83 = vshrl.u32 %v82, 7
    %v84 = vsub.s32 0, %v83
    %v85 = vrot.slane %v79, %v84
    %v87 = vmul.f32 %v77, %v85
    %v88 = vmul.f32 %v78, %v85
    %v90 = vlaneseq
    %v91 = vshrl.u32 %v90, 7
    %v92 = vsub.s32 0, %v91
    %v93 = vrot.slane %v80, %v92
    %v95 = vadd.f32 %v87, %v93
    %v96 = vadd.f32 %v88, %v93
    %97 = vst.msk [vmem:[#allocation7] sm:$0xff] %vm51, %v95
    %98 = vst.msk [vmem:[#allocation7 + $0x8] sm:$0xff] %vm51, %v96
    %v99 = vld [vmem:[#allocation5] sm:$0xff]
    %v100 = vld [vmem:[#allocation5 + $0x8] sm:$0xff]
    %v101 = vmul.f32 %v99, %v99
    %v102 = vmul.f32 %v100, %v100
    %vm103 = vcmask 97280
    %v104 = vsel %vm103, %v101, 0.0
    %105 = vadd.xlane.f32.xlu0 %v104
    %v106 = vpop.xlane.xlu0 %105
    %v107 = vsel %vm103, %v102, 0.0
    %108 = vadd.xlane.f32.xlu0 %v107
    %v109 = vpop.xlane.xlu0 %108
    %vm110 = vcmp.gt.f32.partialorder %v106, 0.0
    %vm111 = vcmp.gt.f32.partialorder %v109, 0.0
    %v112 = vrsqrt.pop %v106
    %v113 = vrsqrt.pop %v109
    %v114 = vmul.f32 %v112, 2.0
    %v115 = vmul.f32 %v113, 2.0
    %v116 = vsel %vm110, %v114, 1.0
    %v117 = vsel %vm111, %v115, 1.0
    %v118 = vmul.f32 %v99, %v116
    %v119 = vmul.f32 %v100, %v117
    %120 = vst.msk [vmem:[#allocation8] sm:$0xff] %vm103, %v118
    %121 = vst.msk [vmem:[#allocation8 + $0x8] sm:$0xff] %vm103, %v119
    // Predicated region
    $region26: #{tpu_custom_call.1} parent=1 // pred_check
      _
    $region27: #{tpu_custom_call.1} parent=1 // pred_check_branch
      %123 = sbr.rel (0) target = $region29
    $region28: #{tpu_custom_call.1} parent=1 // pred_region
      %s125 = ssub.s32 256, 256
      %126 = vsyncadd [#allocation4], %s125
      %s127 = sshll.u32 [#allocation7], 4
      %s128 = int_to_ptr.vmem [resolvable:$true] %s127
      %133 = dma.vmem_to_hbm [thread:$0]  %s128, 256, %s4, [#allocation4], 128, 128, 8
    $region29: #{tpu_custom_call.1} parent=1 // pred_fallthru
      _
    // Predicated region
    $region30: #{tpu_custom_call.1} parent=1 // pred_check
      _
    $region31: #{tpu_custom_call.1} parent=1 // pred_check_branch
      %135 = sbr.rel (0) target = $region33
    $region32: #{tpu_custom_call.1} parent=1 // pred_region
      %s137 = ssub.s32 256, 256
      %138 = vsyncadd [#allocation9], %s137
      %s139 = sshll.u32 [#allocation8], 4
      %s140 = int_to_ptr.vmem [resolvable:$true] %s139
      %145 = dma.vmem_to_hbm [thread:$0]  %s140, 256, %s5, [#allocation9], 128, 128, 8
    $region33: #{tpu_custom_call.1} parent=1 // pred_fallthru
      _
    // Predicated region
    $region34: #{tpu_custom_call.1} parent=1 // pred_check
      _
    $region35: #{tpu_custom_call.1} parent=1 // pred_check_branch
      %147 = sbr.rel (0) target = $region37
    $region36: #{tpu_custom_call.1} parent=1 // pred_region
      %148 = dma.done [#allocation4], 256
    $region37: #{tpu_custom_call.1} parent=1 // pred_fallthru
      _
    // Predicated region
    $region38: #{tpu_custom_call.1} parent=1 // pred_check
      _
    $region39: #{tpu_custom_call.1} parent=1 // pred_check_branch
      %150 = sbr.rel (0) target = $region41
    $region40: #{tpu_custom_call.1} parent=1 // pred_region
      %151 = dma.done [#allocation9], 256
    $region41: #{tpu_custom_call.1} parent=1 // pred_fallthru
      _
    %152 = vsyncpa [#allocation3], 1
    %153 = vsyncpa [#allocation6], 1
    %154 = vsyncpa [#allocation4], 1
    %155 = vsyncpa [#allocation9], 1

</llo_original>
